<compile_context>
chip_gen: v6e
topology: v6e:2x2x1
jax: 0.10.0
libtpu: 0.0.40
codegen_flags: <defaults>
</compile_context>

<pallas_src>
import functools

import jax
import jax.numpy as jnp
from jax.experimental import pallas as pl
from jax.experimental.pallas import tpu as pltpu

_PAD_LOGIT = -30000.0  # padded rows: z = -30000, target = 0  ->  loss == 0 exactly


def _cdiv(a, b):
    return -(-a // b)


def _focal_loss_kernel(x0_ref, x1_ref, t_ref, o_ref, acc_ref, *, alpha, gamma):
    k = pl.program_id(1)

    @pl.when(k == 0)
    def _():
        acc_ref[...] = jnp.zeros_like(acc_ref)

    x0 = x0_ref[...].astype(jnp.float32)    # (BR, L) class-0 logits
    x1 = x1_ref[...].astype(jnp.float32)    # (BR, L) class-1 logits
    tgt = t_ref[...].astype(jnp.float32)    # (BR, L) 0/1 labels

    # p = softmax([x0, x1])[1] = sigmoid(z) with z = x1 - x0.
    # log p = z - softplus(z); log(1-p) = -softplus(z)   (always finite)
    z = x1 - x0
    sp = jnp.maximum(z, 0.0) + jnp.log(1.0 + jnp.exp(-jnp.abs(z)))
    log_1mp = -sp
    log_p = z - sp
    pow_1mp = jnp.exp(gamma * log_1mp)      # (1 - p) ** gamma
    pow_p = jnp.exp(gamma * log_p)          # p ** gamma

    loss = (-alpha * pow_1mp * (tgt * log_p)
            - (1.0 - alpha) * pow_p * ((1.0 - tgt) * log_1mp))

    acc_ref[...] += loss                    # elementwise; no per-step reduction

    @pl.when(k == pl.num_programs(1) - 1)
    def _():
        # one cross-sublane reduce per parallel chunk; lanes stay dense
        o_ref[...] = jnp.sum(acc_ref[...], axis=0, keepdims=True)[None]


def focal_loss(logits, target, *, gamma=2.0, alpha=0.25,
               block_rows=8, max_lane_width=16384):
    """logits: (N, 2) float, target: (N,) 0/1 labels. Returns the scalar mean loss."""
    N, C = logits.shape
    assert C == 2, "binary focal loss: expects 2-class logits (module uses pt[:, 1])"
    assert max_lane_width % 128 == 0

    # ----- lane-dense layout: N is flattened onto the (sublane, lane) plane -----
    lane_width = min(max_lane_width, 128 * _cdiv(N, block_rows * 128))
    # Grow the sublane extent once the lane axis is saturated (bigger blocks,
    # fewer grid steps). Cap at 32 rows -> 2 MiB f32/buffer, which stays well
    # inside the 32 MiB default scoped VMEM (v7x) with double buffering.
    for rows in (16, 32):
        if N >= 4 * rows * lane_width:
            block_rows = max(block_rows, rows)

    block_elems = block_rows * lane_width
    n_blocks = _cdiv(N, block_elems)
    num_par = 2 if n_blocks >= 2 else 1     # use both TCs on v7x; harmless on 1-TC chips
    steps = _cdiv(n_blocks, num_par)
    padded = num_par * steps * block_elems
    rows_total = padded // lane_width
    pad = padded - N

    x0 = jnp.pad(logits[:, 0], (0, pad)).reshape(rows_total, lane_width)
    x1 = jnp.pad(logits[:, 1], (0, pad),
                 constant_values=_PAD_LOGIT).reshape(rows_total, lane_width)
    if jnp.issubdtype(target.dtype, jnp.floating):
        tgt1d = target.reshape(-1)                      # keep (soft) float labels exact
    else:
        tgt1d = target.reshape(-1).astype(jnp.int8)     # 0/1 labels: 1 byte/elem of HBM
    tgt = jnp.pad(tgt1d, (0, pad)).reshape(rows_total, lane_width)

    kernel = functools.partial(_focal_loss_kernel,
                               alpha=float(alpha), gamma=float(gamma))
    in_map = lambda i, k: (i * steps + k, 0)

    partial_sums = pl.pallas_call(
        kernel,
        out_shape=jax.ShapeDtypeStruct((num_par, 1, lane_width), jnp.float32),
        grid_spec=pltpu.PrefetchScalarGridSpec(
            num_scalar_prefetch=0,
            grid=(num_par, steps),
            in_specs=[
                pl.BlockSpec((block_rows, lane_width), in_map),
                pl.BlockSpec((block_rows, lane_width), in_map),
                pl.BlockSpec((block_rows, lane_width), in_map),
            ],
            out_specs=pl.BlockSpec((1, 1, lane_width), lambda i, k: (i, 0, 0)),
            scratch_shapes=[pltpu.VMEM((block_rows, lane_width), jnp.float32)],
        ),
        compiler_params=pltpu.CompilerParams(
            dimension_semantics=("parallel", "arbitrary"),
        ),
    )(x0, x1, tgt)

    # final cross-lane reduce + mean over the true (unpadded) element count
    return jnp.sum(partial_sums) / jnp.float32(N)


def _focal_loss_ref(logits, target, gamma=2.0, alpha=0.25):
    pt = jax.nn.softmax(logits.astype(jnp.float32), axis=1)
    p = pt[:, 1]
    t = target.astype(jnp.float32)
    loss = (-alpha * (1 - p) ** gamma * (t * jnp.log(p))
            - (1 - alpha) * p ** gamma * ((1 - t) * jnp.log(1 - p)))
    return jnp.mean(loss)


if __name__ == "__main__":
    key = jax.random.PRNGKey(0)
    k1, k2, k3, k4 = jax.random.split(key, 4)

    # Case 1: small binary-classification batch (the shape the module implies).
    N1 = 64
    logits1 = jax.random.normal(k1, (N1, 2), dtype=jnp.float32)
    target1 = jax.random.bernoulli(k2, 0.5, (N1,)).astype(jnp.int32)
    out1 = jax.block_until_ready(focal_loss(logits1, target1))
    ref1 = jax.block_until_ready(_focal_loss_ref(logits1, target1))
    assert jnp.allclose(out1, ref1, rtol=1e-5, atol=1e-5), (out1, ref1)

    # Case 2: tiny lane width so a small problem still exercises multiple grid
    # steps, the 2-way parallel split, accumulation and the padded tail.
    N2 = 4096
    logits2 = jax.random.normal(k3, (N2, 2), dtype=jnp.float32)
    target2 = jax.random.bernoulli(k4, 0.5, (N2,)).astype(jnp.int32)
    out2 = jax.block_until_ready(focal_loss(logits2, target2, max_lane_width=128))
    ref2 = jax.block_until_ready(_focal_loss_ref(logits2, target2))
    assert jnp.allclose(out2, ref2, rtol=1e-5, atol=1e-5), (out2, ref2)

    print("KERNEL_OK")
</pallas_src>

<mosaic_0001>
module attributes {stable_mosaic.version = 11 : i64} {
  func.func @_focal_loss_kernel(%arg0: i32, %arg1: i32, %arg2: memref<8x128xf32, #tpu.memory_space<vmem>>, %arg3: memref<8x128xf32, #tpu.memory_space<vmem>>, %arg4: memref<8x128xi8, #tpu.memory_space<vmem>>, %arg5: memref<1x1x128xf32, #tpu.memory_space<vmem>>, %arg6: memref<8x128xf32, #tpu.memory_space<vmem>>) attributes {dimension_semantics = [#tpu.dimension_semantics<parallel>, #tpu.dimension_semantics<arbitrary>], iteration_bounds = array<i64: 1, 1>, scalar_prefetch = 0 : i64, scratch_operands = 1 : i64, tpu.core_type = #tpu.core_type<tc>, window_params = [{transform_indices = @transform_0, window_bounds = array<i64: 8, 128>}, {transform_indices = @transform_1, window_bounds = array<i64: 8, 128>}, {transform_indices = @transform_2, window_bounds = array<i64: 8, 128>}, {transform_indices = @transform_3, window_bounds = array<i64: 1, 1, 128>}]} {
    %c0_i32 = arith.constant 0 : i32
    %0 = arith.cmpi eq, %arg1, %c0_i32 : i32
    %1 = arith.extui %0 : i1 to i32
    %c0_i32_0 = arith.constant 0 : i32
    %2 = arith.cmpi ne, %1, %c0_i32_0 : i32
    scf.if %2 {
      %cst_20 = arith.constant 0.000000e+00 : f32
      %44 = vector.broadcast %cst_20 : f32 to vector<8x128xf32>
      %c0_21 = arith.constant 0 : index
      %c0_22 = arith.constant 0 : index
      %45 = vector.load %arg6[%c0_21, %c0_22] : memref<8x128xf32, #tpu.memory_space<vmem>>, vector<8x128xf32>
      tpu.vector_store %arg6[%c0_21, %c0_22], %44 {strides = array<i32>} : memref<8x128xf32, #tpu.memory_space<vmem>>, vector<8x128xf32>,
    } else {
    }
    %c0 = arith.constant 0 : index
    %c0_1 = arith.constant 0 : index
    %3 = vector.load %arg2[%c0, %c0_1] : memref<8x128xf32, #tpu.memory_space<vmem>>, vector<8x128xf32>
    %c0_2 = arith.constant 0 : index
    %c0_3 = arith.constant 0 : index
    %4 = vector.load %arg3[%c0_2, %c0_3] : memref<8x128xf32, #tpu.memory_space<vmem>>, vector<8x128xf32>
    %c0_4 = arith.constant 0 : index
    %c0_5 = arith.constant 0 : index
    %5 = vector.load %arg4[%c0_4, %c0_5] : memref<8x128xi8, #tpu.memory_space<vmem>>, vector<8x128xi8>
    %6 = arith.sitofp %5 : vector<8x128xi8> to vector<8x128xf32>
    %7 = arith.subf %4, %3 : vector<8x128xf32>
    %cst = arith.constant 0.000000e+00 : f32
    %8 = vector.broadcast %cst : f32 to vector<8x128xf32>
    %9 = arith.maximumf %7, %8 : vector<8x128xf32>
    %10 = math.absf %7 : vector<8x128xf32>
    %cst_6 = arith.constant 0.000000e+00 : f32
    %11 = vector.broadcast %cst_6 : f32 to vector<8x128xf32>
    %12 = arith.subf %11, %10 : vector<8x128xf32>
    %13 = math.exp %12 : vector<8x128xf32>
    %cst_7 = arith.constant 1.000000e+00 : f32
    %14 = vector.broadcast %cst_7 : f32 to vector<8x128xf32>
    %15 = arith.addf %14, %13 : vector<8x128xf32>
    %16 = math.log %15 : vector<8x128xf32>
    %17 = arith.addf %9, %16 : vector<8x128xf32>
    %cst_8 = arith.constant 0.000000e+00 : f32
    %18 = vector.broadcast %cst_8 : f32 to vector<8x128xf32>
    %19 = arith.subf %18, %17 : vector<8x128xf32>
    %20 = arith.subf %7, %17 : vector<8x128xf32>
    %cst_9 = arith.constant 2.000000e+00 : f32
    %21 = vector.broadcast %cst_9 : f32 to vector<8x128xf32>
    %22 = arith.mulf %21, %19 : vector<8x128xf32>
    %23 = math.exp %22 : vector<8x128xf32>
    %cst_10 = arith.constant 2.000000e+00 : f32
    %24 = vector.broadcast %cst_10 : f32 to vector<8x128xf32>
    %25 = arith.mulf %24, %20 : vector<8x128xf32>
    %26 = math.exp %25 : vector<8x128xf32>
    %cst_11 = arith.constant -2.500000e-01 : f32
    %27 = vector.broadcast %cst_11 : f32 to vector<8x128xf32>
    %28 = arith.mulf %27, %23 : vector<8x128xf32>
    %29 = arith.mulf %6, %20 : vector<8x128xf32>
    %30 = arith.mulf %28, %29 : vector<8x128xf32>
    %cst_12 = arith.constant 7.500000e-01 : f32
    %31 = vector.broadcast %cst_12 : f32 to vector<8x128xf32>
    %32 = arith.mulf %31, %26 : vector<8x128xf32>
    %cst_13 = arith.constant 1.000000e+00 : f32
    %33 = vector.broadcast %cst_13 : f32 to vector<8x128xf32>
    %34 = arith.subf %33, %6 : vector<8x128xf32>
    %35 = arith.mulf %34, %19 : vector<8x128xf32>
    %36 = arith.mulf %32, %35 : vector<8x128xf32>
    %37 = arith.subf %30, %36 : vector<8x128xf32>
    %c0_14 = arith.constant 0 : index
    %c0_15 = arith.constant 0 : index
    %38 = vector.load %arg6[%c0_14, %c0_15] : memref<8x128xf32, #tpu.memory_space<vmem>>, vector<8x128xf32>
    %39 = arith.addf %38, %37 : vector<8x128xf32>
    %c0_16 = arith.constant 0 : index
    %c0_17 = arith.constant 0 : index
    %40 = vector.load %arg6[%c0_16, %c0_17] : memref<8x128xf32, #tpu.memory_space<vmem>>, vector<8x128xf32>
    tpu.vector_store %arg6[%c0_16, %c0_17], %39 {strides = array<i32>} : memref<8x128xf32, #tpu.memory_space<vmem>>, vector<8x128xf32>,
    %c0_i32_18 = arith.constant 0 : i32
    %41 = arith.cmpi eq, %arg1, %c0_i32_18 : i32
    %42 = arith.extui %41 : i1 to i32
    %c0_i32_19 = arith.constant 0 : i32
    %43 = arith.cmpi ne, %42, %c0_i32_19 : i32
    scf.if %43 {
      %c0_20 = arith.constant 0 : index
      %c0_21 = arith.constant 0 : index
      %44 = vector.load %arg6[%c0_20, %c0_21] : memref<8x128xf32, #tpu.memory_space<vmem>>, vector<8x128xf32>
      %cst_22 = arith.constant dense<0.000000e+00> : vector<128xf32>
      %45 = vector.multi_reduction <add>, %44, %cst_22 [0] : vector<8x128xf32> to vector<128xf32>
      %46 = vector.shape_cast %45 : vector<128xf32> to vector<1x128xf32>
      %47 = vector.shape_cast %46 : vector<1x128xf32> to vector<1x1x128xf32>
      %c0_23 = arith.constant 0 : index
      %c0_24 = arith.constant 0 : index
      %c0_25 = arith.constant 0 : index
      %48 = vector.load %arg5[%c0_23, %c0_24, %c0_25] : memref<1x1x128xf32, #tpu.memory_space<vmem>>, vector<1x1x128xf32>
      tpu.vector_store %arg5[%c0_23, %c0_24, %c0_25], %47 {strides = array<i32>} : memref<1x1x128xf32, #tpu.memory_space<vmem>>, vector<1x1x128xf32>,
    } else {
    }
    return
  }
  func.func @transform_0(%arg0: i32, %arg1: i32) -> (i32, i32) {
    %c1_i32 = arith.constant 1 : i32
    %0 = arith.muli %arg0, %c1_i32 : i32
    %1 = arith.addi %0, %arg1 : i32
    %c0_i32 = arith.constant 0 : i32
    %c0_i32_0 = arith.constant 0 : i32
    return %1, %c0_i32 : i32, i32
  }
  func.func @transform_1(%arg0: i32, %arg1: i32) -> (i32, i32) {
    %c1_i32 = arith.constant 1 : i32
    %0 = arith.muli %arg0, %c1_i32 : i32
    %1 = arith.addi %0, %arg1 : i32
    %c0_i32 = arith.constant 0 : i32
    %c0_i32_0 = arith.constant 0 : i32
    return %1, %c0_i32 : i32, i32
  }
  func.func @transform_2(%arg0: i32, %arg1: i32) -> (i32, i32) {
    %c1_i32 = arith.constant 1 : i32
    %0 = arith.muli %arg0, %c1_i32 : i32
    %1 = arith.addi %0, %arg1 : i32
    %c0_i32 = arith.constant 0 : i32
    %c0_i32_0 = arith.constant 0 : i32
    return %1, %c0_i32 : i32, i32
  }
  func.func @transform_3(%arg0: i32, %arg1: i32) -> (i32, i32, i32) {
    %c0_i32 = arith.constant 0 : i32
    %c0_i32_0 = arith.constant 0 : i32
    %c0_i32_1 = arith.constant 0 : i32
    return %arg0, %c0_i32, %c0_i32_0 : i32, i32, i32
  }
}

</mosaic_0001>

<llo_original>
// kernel: tpu_custom_call.1
$region0: #{tpu_custom_call.1}
  #allocation0 [shape = 'u32[]', space=smem, size = 0x4, offset = 0x4, fixed_abs, tag = 'smem constant byte address 0x4 - core index']
  #allocation1 [shape = 'u32[144,128]{1,0:T(1,128)}', space=vmem, size = 0x12000, scoped, tag = 'internal scratch']
  #allocation2 [shape = 'f32[8,128]{1,0:T(8,128)}', space=vmem, size = 0x1000, scoped, tag = 'scratch operand']
  %s0 = inlined_call_operand.hbm [shape: f32[8,128], index: 0, kind: input, shape index: {}]
  %s1 = inlined_call_operand.hbm [shape: f32[8,128], index: 1, kind: input, shape index: {}]
  %s2 = inlined_call_operand.vmem [shape: s8[8,128], index: 2, kind: input, shape index: {}]
  %s3 = inlined_call_operand.hbm [shape: f32[1,1,128], index: 3, kind: output, shape index: {}]
  %s4 = sld [smem:[#allocation0]]
  $region38: #{tpu_custom_call.1} parent=0
    _
  %s6 = ssub.s32 1, %s4
  %s7 = scalar_select 0, %s6, %s4
  $region1: #{tpu_custom_call.1} parent=0
    #allocation3 [shape = 'u8[4096]{0}', space=vmem, size = 0x1000, scoped, tag = 'input window, operand 0, single buffered']
    #allocation4 [shape = 's32[1]{0}', space=sflag, size = 0x4, scoped, tag = 'scoped memory for tpu_custom_call.1']
    #allocation5 [shape = 's32[1]{0}', space=sflag, size = 0x4, scoped, tag = 'scoped memory for tpu_custom_call.1']
    #allocation6 [shape = 'u8[4096]{0}', space=vmem, size = 0x1000, scoped, tag = 'input window, operand 1, single buffered']
    #allocation7 [shape = 's32[1]{0}', space=sflag, size = 0x4, scoped, tag = 'scoped memory for tpu_custom_call.1']
    #allocation8 [shape = 'u8[512]{0}', space=vmem, size = 0x400, scoped, tag = 'output window, operand 0, single buffered']
    %8 = vsyncpa [#allocation4], 0
    %9 = vsyncpa [#allocation7], 0
    %10 = vsyncpa [#allocation5], 0
    // Predicated region
    $region2: #{tpu_custom_call.1} parent=1 // pred_check
      _
    $region3: #{tpu_custom_call.1} parent=1 // pred_check_branch
      %12 = sbr.rel (0) target = $region5
    $region4: #{tpu_custom_call.1} parent=1 // pred_region
      %s13 = sadd.s32 0, 0
      %s15 = ssub.s32 128, 128
      %16 = vsyncadd [#allocation4], %s15
      %s17 = smul.addr %s13, 128
      %s18 = scalar_lea.hbm %s0, %s17
      %s20 = sshll.u32 [#allocation3], 4
      %s21 = int_to_ptr.vmem [resolvable:$true] %s20
      %23 = dma.hbm_to_vmem [thread:$0]  %s18, 128, %s21, [#allocation4]
    $region5: #{tpu_custom_call.1} parent=1 // pred_fallthru
      _
    // Predicated region
    $region6: #{tpu_custom_call.1} parent=1 // pred_check
      _
    $region7: #{tpu_custom_call.1} parent=1 // pred_check_branch
      %25 = sbr.rel (0) target = $region9
    $region8: #{tpu_custom_call.1} parent=1 // pred_region
      %s26 = sadd.s32 0, 0
      %s28 = ssub.s32 128, 128
      %29 = vsyncadd [#allocation7], %s28
      %s30 = smul.addr %s26, 128
      %s31 = scalar_lea.hbm %s1, %s30
      %s33 = sshll.u32 [#allocation6], 4
      %s34 = int_to_ptr.vmem [resolvable:$true] %s33
      %36 = dma.hbm_to_vmem [thread:$0]  %s31, 128, %s34, [#allocation7]
    $region9: #{tpu_custom_call.1} parent=1 // pred_fallthru
      _
    // Predicated region
    $region10: #{tpu_custom_call.1} parent=1 // pred_check
      _
    $region11: #{tpu_custom_call.1} parent=1 // pred_check_branch
      %38 = sbr.rel (0) target = $region13
    $region12: #{tpu_custom_call.1} parent=1 // pred_region
      %s39 = sadd.s32 0, 0
      %p40 = scmp.lt.s32.totalorder %s39, 0
      %s41 = scalar_select %p40, %s39, 0
      %s42 = smul.addr %s41, 2
      %s43 = scalar_lea.vmem %s2, %s42
      %s44 = sadd.s32 0, 0
    $region13: #{tpu_custom_call.1} parent=1 // pred_fallthru
      _
    // Predicated region
    $region14: #{tpu_custom_call.1} parent=1 // pred_check
      _
    $region15: #{tpu_custom_call.1} parent=1 // pred_check_branch
      %46 = sbr.rel (0) target = $region17
    $region16: #{tpu_custom_call.1} parent=1 // pred_region
      %47 = dma.done [#allocation4], 128
    $region17: #{tpu_custom_call.1} parent=1 // pred_fallthru
      _
    // Predicated region
    $region18: #{tpu_custom_call.1} parent=1 // pred_check
      _
    $region19: #{tpu_custom_call.1} parent=1 // pred_check_branch
      %49 = sbr.rel (0) target = $region21
    $region20: #{tpu_custom_call.1} parent=1 // pred_region
      %50 = dma.done [#allocation7], 128
    $region21: #{tpu_custom_call.1} parent=1 // pred_fallthru
      _
    %s51 = sadd.s32 0, 0
    %p52 = scmp.lt.s32.totalorder %s51, 0
    %s53 = scalar_select %p52, %s51, 0
    %s54 = smul.addr %s53, 2
    %s55 = scalar_lea.vmem %s2, %s54
    %s56 = sadd.s32 0, 0
    %s57 = sadd.s32 0, 0
    %s58 = sadd.s32 0, 0
    %p59 = scmp.lt.s32.totalorder %s58, 0
    %s60 = scalar_select %p59, %s58, 0
    %s61 = smul.addr %s60, 2
    %s62 = scalar_lea.vmem %s2, %s61
    %s63 = sadd.s32 0, 0
    %p64 = scmp.eq.s32.totalorder 0, 0
    // Predicated region
    $region22: #{tpu_custom_call.1} parent=1 // pred_check
      %p65 = pneg %p64
    $region23: #{tpu_custom_call.1} parent=1 // pred_check_branch
      %67 = sbr.rel (%p65) target = $region25
    $region24: #{tpu_custom_call.1} parent=1 // pred_region
      %68 = vst [vmem:[#allocation2] sm:$0xff] 0.0
    $region25: #{tpu_custom_call.1} parent=1 // pred_fallthru
      _
    %v69 = vld [vmem:[#allocation3] sm:$0xff]
    %v70 = vld [vmem:[#allocation6] sm:$0xff]
    %v71 = vld [vmem:[%s62] sm:$0x3]
    %v72 = vunpack.c.0.s8 %v71
    %v73 = vcvt.s32.f32 %v72
    %v74 = vsub.f32 %v70, %v69
    %v75 = vmax.f32 %v74, 0.0
    %v76 = vand.u32 2147483647, %v74
    %v77 = vsub.f32 0.0, %v76
    %v78 = vmul.f32 %v77, 1.442695
    %v79 = vpow.pop %v78
    %v80 = vadd.f32 %v79, 1.0
    %v81 = vlog2.pop %v80
    %v82 = vmul.f32 %v81, 0.6931472
    %v83 = vadd.f32 %v75, %v82
    %v84 = vsub.f32 0.0, %v83
    %v85 = vsub.f32 %v74, %v83
    %v86 = vmul.f32 %v84, 2.0
    %v87 = vmul.f32 %v86, 1.442695
    %v88 = vpow.pop %v87
    %v89 = vmul.f32 %v85, 2.0
    %v90 = vmul.f32 %v89, 1.442695
    %v91 = vpow.pop %v90
    %v92 = vmul.f32 %v88, -0.25
    %v93 = vmul.f32 %v73, %v85
    %v94 = vmul.f32 %v92, %v93
    %v95 = vmul.f32 %v91, 0.75
    %v96 = vsub.f32 1.0, %v73
    %v97 = vmul.f32 %v96, %v84
    %v98 = vmul.f32 %v95, %v97
    %v99 = vsub.f32 %v94, %v98
    %v100 = vld [vmem:[#allocation2] sm:$0xff]
    %v101 = vadd.f32 %v100, %v99
    %102 = vst [vmem:[#allocation2] sm:$0xff] %v101
    // Predicated region
    $region26: #{tpu_custom_call.1} parent=1 // pred_check
      %p103 = pneg %p64
    $region27: #{tpu_custom_call.1} parent=1 // pred_check_branch
      %105 = sbr.rel (%p103) target = $region29
    $region28: #{tpu_custom_call.1} parent=1 // pred_region
      %v106 = vld [vmem:[#allocation2] sm:$0xff]
      %v107 = vrot.slane %v106, 4
      %v108 = vadd.f32 %v106, %v107
      %v109 = vrot.slane %v108, 2
      %v110 = vadd.f32 %v108, %v109
      %v111 = vrot.slane %v110, 1
      %v112 = vadd.f32 %v110, %v111
      %113 = vst [vmem:[#allocation8] sm:$0x1] %v112
    $region29: #{tpu_custom_call.1} parent=1 // pred_fallthru
      _
    // Predicated region
    $region30: #{tpu_custom_call.1} parent=1 // pred_check
      _
    $region31: #{tpu_custom_call.1} parent=1 // pred_check_branch
      %115 = sbr.rel (0) target = $region33
    $region32: #{tpu_custom_call.1} parent=1 // pred_region
      %s117 = ssub.s32 16, 16
      %118 = vsyncadd [#allocation5], %s117
      %s120 = sshll.u32 [#allocation8], 4
      %s121 = int_to_ptr.vmem [resolvable:$true] %s120
      %123 = dma.vmem_to_hbm [thread:$0]  %s121, 16, %s3, [#allocation5]
    $region33: #{tpu_custom_call.1} parent=1 // pred_fallthru
      _
    // Predicated region
    $region34: #{tpu_custom_call.1} parent=1 // pred_check
      _
    $region35: #{tpu_custom_call.1} parent=1 // pred_check_branch
      %125 = sbr.rel (0) target = $region37
    $region36: #{tpu_custom_call.1} parent=1 // pred_region
      %126 = dma.done [#allocation5], 16
    $region37: #{tpu_custom_call.1} parent=1 // pred_fallthru
      _
    %127 = vsyncpa [#allocation4], 1
    %128 = vsyncpa [#allocation7], 1
    %129 = vsyncpa [#allocation5], 1

</llo_original>
